<compile_context>
chip_gen: v7x
topology: tpu7x:2x2x1
jax: 0.10.0
libtpu: 0.0.40
codegen_flags: <defaults>
</compile_context>

<pallas_src>
import functools

import jax
import jax.numpy as jnp
from jax import lax
from jax.experimental import pallas as pl
from jax.experimental.pallas import tpu as pltpu

_LANE = 128
_SUBLANE = 8


# --------------------------------------------------------------------------
# Kernels
# --------------------------------------------------------------------------
def _fe_kernel_inplace(x_ref, w_ref, b_ref, o_ref, *, activation):
    """Accumulate directly into the f32 output tile (no scratch).

    x_ref: (tm, tk)  activations tile
    w_ref: (tn, tk)  weight tile in native (Out, In) layout
    b_ref: (1,  tn)  bias tile (f32)
    o_ref: (tm, tn)  f32 output tile (resident across the k axis)
    """
    k = pl.program_id(2)

    @pl.when(k == 0)
    def _():
        o_ref[...] = jnp.zeros_like(o_ref)

    # Contract the shared K axis: (tm, tk) . (tn, tk)^T -> (tm, tn) on the
    # MXU without materializing a transposed weight in HBM.
    # (If a Mosaic version emits a per-tile vxpose here, pre-transpose W once
    # in prepare_feature_extractor_params instead -- check pl.lower_as_mlir.)
    o_ref[...] += lax.dot_general(
        x_ref[...], w_ref[...],
        dimension_numbers=(((1,), (1,)), ((), ())),
        preferred_element_type=jnp.float32)

    @pl.when(k == pl.num_programs(2) - 1)
    def _():
        o_ref[...] = activation(o_ref[...] + b_ref[...])


def _fe_kernel_acc(x_ref, w_ref, b_ref, o_ref, acc_ref, *, activation):
    """f32 accumulator-scratch path for non-f32 output dtypes."""
    k = pl.program_id(2)

    @pl.when(k == 0)
    def _():
        acc_ref[...] = jnp.zeros_like(acc_ref)

    acc_ref[...] += lax.dot_general(
        x_ref[...], w_ref[...],
        dimension_numbers=(((1,), (1,)), ((), ())),
        preferred_element_type=jnp.float32)

    @pl.when(k == pl.num_programs(2) - 1)
    def _():
        o_ref[...] = activation(acc_ref[...] + b_ref[...]).astype(o_ref.dtype)


# --------------------------------------------------------------------------
# Tiling helpers
# --------------------------------------------------------------------------
def _round_up(x, m):
    return (x + m - 1) // m * m


def _vmem_capacity_bytes():
    try:
        return int(pltpu.get_tpu_info().vmem_capacity_bytes)
    except Exception:
        return 64 * 1024 * 1024  # conservative (v7x-sized) fallback


def _divisor_tiles(dim_pad, cap):
    """Multiples of 128 that divide dim_pad, largest first, capped at `cap`."""
    n = dim_pad // _LANE
    divs = sorted((d for d in range(1, n + 1) if n % d == 0), reverse=True)
    out = [d * _LANE for d in divs if d * _LANE <= cap]
    return out or [_LANE]


def _pick_tm(batch, cap):
    """Pick tm first, then pad the batch up to a multiple of it."""
    base = _round_up(batch, _SUBLANE)
    tm = min(cap, base)
    # Bound the compute wasted on zero-padded rows to < 1x the real work.
    while tm > _SUBLANE and _round_up(batch, tm) > 2 * base:
        tm = max(_SUBLANE, _round_up(tm // 2, _SUBLANE))
    return tm, _round_up(batch, tm)


def _pick_tiles(batch, k_pad, n_pad, x_bytes, w_bytes, out_bytes,
                needs_acc, vmem_budget):
    large = vmem_budget > (32 << 20)          # v5e / v6e (128 MiB VMEM)
    tm_cap = 512 if large else 256            # v7x / fallback: 64 MiB VMEM
    tk_cap = 2048 if large else 1024
    tn_cap = 2048 if large else 1024

    tm, m_pad = _pick_tm(batch, tm_cap)

    def working_set(tk, tn):
        b = 2 * tm * tk * x_bytes             # double-buffered x tiles
        b += 2 * tn * tk * w_bytes            # double-buffered W tiles
        b += 2 * tm * tn * out_bytes          # output tile (+ writeback buf)
        b += 2 * tn * 4                       # bias tile
        if needs_acc:
            b += tm * tn * 4                  # f32 accumulator scratch
        return b

    # Prefer the largest tk (fewest reduction steps), then the largest tn
    # (fewest weight re-reads, lane-dense output stores) within budget.
    for tk in _divisor_tiles(k_pad, tk_cap):
        for tn in _divisor_tiles(n_pad, tn_cap):
            if working_set(tk, tn) <= vmem_budget:
                return tm, m_pad, tk, tn
    return tm, m_pad, _LANE, _LANE


def _ensure_two_parallel_blocks(tm, m_pad, tn, n_pad):
    """Guarantee >=2 blocks on a 'parallel' axis so both v7x TCs get work."""
    if (m_pad // tm) * (n_pad // tn) >= 2:
        return tm, tn
    smaller_n = [d for d in _divisor_tiles(n_pad, tn) if d < tn]
    if smaller_n:
        return tm, smaller_n[0]               # split N (keeps stores lane-dense)
    if tm >= 2 * _SUBLANE:
        new_tm = _round_up(tm // 2, _SUBLANE)
        if m_pad % new_tm == 0 and m_pad // new_tm >= 2:
            return new_tm, tn                 # split M instead
    return tm, tn


# --------------------------------------------------------------------------
# Parameter prep (one-time, outside the per-call hot path)
# --------------------------------------------------------------------------
def prepare_feature_extractor_params(weight, bias, precision="float32"):
    """Pad K/Out to multiples of 128 (and optionally cast W to bf16) ONCE.

    Returns (w_padded, b_padded) with shapes (N_pad, K_pad) and (1, N_pad);
    the per-call wrapper never re-pads / re-writes the weight to HBM.
    """
    n, k = weight.shape
    n_pad = _round_up(max(n, 1), _LANE)
    k_pad = _round_up(max(k, 1), _LANE)
    w = weight
    if (n_pad, k_pad) != (n, k):
        w = jnp.pad(w, ((0, n_pad - n), (0, k_pad - k)))
    if precision == "bfloat16":
        w = w.astype(jnp.bfloat16)
    b = bias
    if n_pad != n:
        b = jnp.pad(b, (0, n_pad - n))
    b = b.astype(jnp.float32).reshape(1, n_pad)
    return w, b


# --------------------------------------------------------------------------
# Forward (pad x -> pallas_call -> slice), all under one jit
# --------------------------------------------------------------------------
@functools.partial(
    jax.jit, static_argnames=("output_size", "activation", "precision"))
def feature_extractor_forward(x, w_padded, b_padded, *, output_size,
                              activation=jax.nn.relu, precision="float32"):
    """activation(x @ W^T + b) with pre-padded weight/bias.

    x: (B, input_size); w_padded: (N_pad, K_pad); b_padded: (1, N_pad).
    Returns (B, output_size) in x.dtype, or a 1-D empty array if
    output_size == 0 (matching torch.zeros(0) in the reference module).
    """
    if output_size == 0:
        return jnp.zeros((0,), dtype=x.dtype)

    out_dtype = x.dtype
    batch, k_in = x.shape
    n_pad, k_pad = w_padded.shape

    compute_dtype = jnp.bfloat16 if precision == "bfloat16" else x.dtype
    x_c = x.astype(compute_dtype)
    w_c = w_padded if w_padded.dtype == compute_dtype else (
        w_padded.astype(compute_dtype))

    needs_acc = out_dtype != jnp.float32
    x_bytes = jnp.dtype(compute_dtype).itemsize
    w_bytes = jnp.dtype(w_c.dtype).itemsize
    out_bytes = jnp.dtype(out_dtype).itemsize

    vmem_cap = _vmem_capacity_bytes()
    vmem_budget = int(vmem_cap * 0.4)          # double-buffered working set
    vmem_limit = min(int(vmem_cap * 0.75), 100 * 1024 * 1024)

    tm, m_pad, tk, tn = _pick_tiles(batch, k_pad, n_pad, x_bytes, w_bytes,
                                    out_bytes, needs_acc, vmem_budget)
    tm, tn = _ensure_two_parallel_blocks(tm, m_pad, tn, n_pad)

    # Zero padding of the activations is numerically inert for the matmul.
    if (m_pad, k_pad) != (batch, k_in):
        x_c = jnp.pad(x_c, ((0, m_pad - batch), (0, k_pad - k_in)))

    grid = (m_pad // tm, n_pad // tn, k_pad // tk)

    in_specs = [
        pl.BlockSpec((tm, tk), lambda i, j, k: (i, k)),   # x tile
        # NOTE: for tiny tm (small batch) the weight DMA can be exposed; if
        # measured, deepen its pipeline with pipeline_mode=pl.Buffered(3).
        pl.BlockSpec((tn, tk), lambda i, j, k: (j, k)),   # W tile (Out, In)
        pl.BlockSpec((1, tn), lambda i, j, k: (0, j)),    # bias tile
    ]
    out_spec = pl.BlockSpec((tm, tn), lambda i, j, k: (i, j))

    if needs_acc:
        kernel = functools.partial(_fe_kernel_acc, activation=activation)
        scratch = [pltpu.VMEM((tm, tn), jnp.float32)]
    else:
        kernel = functools.partial(_fe_kernel_inplace, activation=activation)
        scratch = []

    out_p = pl.pallas_call(
        kernel,
        out_shape=jax.ShapeDtypeStruct((m_pad, n_pad), out_dtype),
        grid_spec=pltpu.PrefetchScalarGridSpec(
            num_scalar_prefetch=0,
            grid=grid,
            in_specs=in_specs,
            out_specs=out_spec,
            scratch_shapes=scratch,
        ),
        compiler_params=pltpu.CompilerParams(
            dimension_semantics=("parallel", "parallel", "arbitrary"),
            vmem_limit_bytes=vmem_limit),
    )(x_c, w_c, b_padded)

    if m_pad == batch and n_pad == output_size:
        return out_p
    return out_p[:batch, :output_size]


def feature_extractor_apply(x, weight, bias, activation=jax.nn.relu,
                            precision="float32"):
    """Convenience wrapper: prep + forward in one call.

    For repeated calls with the same parameters, run
    prepare_feature_extractor_params once and call
    feature_extractor_forward directly (avoids re-padding the weight).
    """
    output_size = weight.shape[0]
    if output_size == 0:
        return jnp.zeros((0,), dtype=x.dtype)
    w_p, b_p = prepare_feature_extractor_params(weight, bias, precision)
    return feature_extractor_forward(
        x, w_p, b_p, output_size=output_size,
        activation=activation, precision=precision)


# --------------------------------------------------------------------------
# Demo / correctness checks
# --------------------------------------------------------------------------
if __name__ == "__main__":
    key = jax.random.PRNGKey(0)
    k_x, k_w, k_b = jax.random.split(key, 3)

    batch, input_size, output_size = 8, 32, 32

    x = jax.random.normal(k_x, (batch, input_size), dtype=jnp.float32)
    bound = 1.0 / (input_size ** 0.5)
    weight = jax.random.uniform(k_w, (output_size, input_size),
                                minval=-bound, maxval=bound, dtype=jnp.float32)
    bias = jax.random.uniform(k_b, (output_size,),
                              minval=-bound, maxval=bound, dtype=jnp.float32)

    # 1) ReLU, float32 precision (default).
    out = jax.block_until_ready(feature_extractor_apply(x, weight, bias))
    ref = jnp.maximum(x @ weight.T + bias, 0.0)
    assert out.shape == (batch, output_size)
    assert jnp.allclose(out, ref, atol=1e-5, rtol=1e-5)

    # 2) Configurable activation (tanh) -- activation is threaded, not baked in.
    out_t = jax.block_until_ready(
        feature_extractor_apply(x, weight, bias, activation=jnp.tanh))
    assert jnp.allclose(out_t, jnp.tanh(x @ weight.T + bias), atol=1e-5, rtol=1e-5)

    # 3) bf16 MXU path (gated precision flag), f32 accumulation.
    out_bf = jax.block_until_ready(
        feature_extractor_apply(x, weight, bias, precision="bfloat16"))
    assert jnp.allclose(out_bf, ref, atol=2e-2, rtol=2e-2)

    # 4) Ragged shapes: exercises K/N padding, multi-tile N grid, >=2 blocks.
    k_x2, k_w2, k_b2 = jax.random.split(jax.random.PRNGKey(1), 3)
    B2, In2, Out2 = 50, 200, 300
    x2 = jax.random.normal(k_x2, (B2, In2), dtype=jnp.float32)
    w2 = jax.random.normal(k_w2, (Out2, In2), dtype=jnp.float32) * 0.05
    b2 = jax.random.normal(k_b2, (Out2,), dtype=jnp.float32) * 0.05
    out2 = jax.block_until_ready(feature_extractor_apply(x2, w2, b2))
    ref2 = jnp.maximum(x2 @ w2.T + b2, 0.0)
    assert out2.shape == (B2, Out2)
    assert jnp.allclose(out2, ref2, atol=1e-4, rtol=1e-4)

    # 5) output_size == 0 path (no kernel launch; matches torch.zeros(0)).
    empty = feature_extractor_apply(
        x, jnp.zeros((0, input_size), jnp.float32), jnp.zeros((0,), jnp.float32))
    assert empty.shape == (0,)

    print("KERNEL_OK")
</pallas_src>

<mosaic_0001>
module attributes {stable_mosaic.version = 11 : i64} {
  func.func @_fe_kernel_inplace(%arg0: i32, %arg1: i32, %arg2: i32, %arg3: memref<8x128xf32, #tpu.memory_space<vmem>>, %arg4: memref<128x128xf32, #tpu.memory_space<vmem>>, %arg5: memref<1x128xf32, #tpu.memory_space<vmem>>, %arg6: memref<8x128xf32, #tpu.memory_space<vmem>>) attributes {dimension_semantics = [#tpu.dimension_semantics<parallel>, #tpu.dimension_semantics<parallel>, #tpu.dimension_semantics<arbitrary>], iteration_bounds = array<i64: 1, 1, 1>, scalar_prefetch = 0 : i64, scratch_operands = 0 : i64, tpu.core_type = #tpu.core_type<tc>, window_params = [{transform_indices = @transform_0, window_bounds = array<i64: 8, 128>}, {transform_indices = @transform_1, window_bounds = array<i64: 128, 128>}, {transform_indices = @transform_2, window_bounds = array<i64: 1, 128>}, {transform_indices = @transform_3, window_bounds = array<i64: 8, 128>}]} {
    %c0_i32 = arith.constant 0 : i32
    %0 = arith.cmpi eq, %arg2, %c0_i32 : i32
    %1 = arith.extui %0 : i1 to i32
    %c0_i32_0 = arith.constant 0 : i32
    %2 = arith.cmpi ne, %1, %c0_i32_0 : i32
    scf.if %2 {
      %cst_10 = arith.constant 0.000000e+00 : f32
      %12 = vector.broadcast %cst_10 : f32 to vector<8x128xf32>
      %c0_11 = arith.constant 0 : index
      %c0_12 = arith.constant 0 : index
      %13 = vector.load %arg6[%c0_11, %c0_12] : memref<8x128xf32, #tpu.memory_space<vmem>>, vector<8x128xf32>
      tpu.vector_store %arg6[%c0_11, %c0_12], %12 {strides = array<i32>} : memref<8x128xf32, #tpu.memory_space<vmem>>, vector<8x128xf32>,
    } else {
    }
    %c0 = arith.constant 0 : index
    %c0_1 = arith.constant 0 : index
    %3 = vector.load %arg6[%c0, %c0_1] : memref<8x128xf32, #tpu.memory_space<vmem>>, vector<8x128xf32>
    %c0_2 = arith.constant 0 : index
    %c0_3 = arith.constant 0 : index
    %4 = vector.load %arg3[%c0_2, %c0_3] : memref<8x128xf32, #tpu.memory_space<vmem>>, vector<8x128xf32>
    %c0_4 = arith.constant 0 : index
    %c0_5 = arith.constant 0 : index
    %5 = vector.load %arg4[%c0_4, %c0_5] : memref<128x128xf32, #tpu.memory_space<vmem>>, vector<128x128xf32>
    %cst = arith.constant dense<0.000000e+00> : vector<8x128xf32>
    %6 = tpu.matmul %4, %5, %cst {dimension_numbers = #tpu.dot_dimension_numbers<[1], [1], [0], [0], [0, 0, 1, 0], [], []>} : vector<8x128xf32>, vector<128x128xf32>, vector<8x128xf32> -> vector<8x128xf32>
    %7 = arith.addf %3, %6 : vector<8x128xf32>
    %c0_6 = arith.constant 0 : index
    %c0_7 = arith.constant 0 : index
    %8 = vector.load %arg6[%c0_6, %c0_7] : memref<8x128xf32, #tpu.memory_space<vmem>>, vector<8x128xf32>
    tpu.vector_store %arg6[%c0_6, %c0_7], %7 {strides = array<i32>} : memref<8x128xf32, #tpu.memory_space<vmem>>, vector<8x128xf32>,
    %c0_i32_8 = arith.constant 0 : i32
    %9 = arith.cmpi eq, %arg2, %c0_i32_8 : i32
    %10 = arith.extui %9 : i1 to i32
    %c0_i32_9 = arith.constant 0 : i32
    %11 = arith.cmpi ne, %10, %c0_i32_9 : i32
    scf.if %11 {
      %c0_10 = arith.constant 0 : index
      %c0_11 = arith.constant 0 : index
      %12 = vector.load %arg6[%c0_10, %c0_11] : memref<8x128xf32, #tpu.memory_space<vmem>>, vector<8x128xf32>
      %c0_12 = arith.constant 0 : index
      %c0_13 = arith.constant 0 : index
      %13 = vector.load %arg5[%c0_12, %c0_13] : memref<1x128xf32, #tpu.memory_space<vmem>>, vector<1x128xf32>
      %14 = vector.broadcast %13 : vector<1x128xf32> to vector<8x128xf32>
      %15 = arith.addf %12, %14 : vector<8x128xf32>
      %cst_14 = arith.constant 0.000000e+00 : f32
      %16 = vector.broadcast %cst_14 : f32 to vector<8x128xf32>
      %17 = arith.maximumf %15, %16 : vector<8x128xf32>
      %c0_15 = arith.constant 0 : index
      %c0_16 = arith.constant 0 : index
      %18 = vector.load %arg6[%c0_15, %c0_16] : memref<8x128xf32, #tpu.memory_space<vmem>>, vector<8x128xf32>
      tpu.vector_store %arg6[%c0_15, %c0_16], %17 {strides = array<i32>} : memref<8x128xf32, #tpu.memory_space<vmem>>, vector<8x128xf32>,
    } else {
    }
    return
  }
  func.func @transform_0(%arg0: i32, %arg1: i32, %arg2: i32) -> (i32, i32) {
    %c0_i32 = arith.constant 0 : i32
    return %arg0, %arg2 : i32, i32
  }
  func.func @transform_1(%arg0: i32, %arg1: i32, %arg2: i32) -> (i32, i32) {
    %c0_i32 = arith.constant 0 : i32
    return %arg1, %arg2 : i32, i32
  }
  func.func @transform_2(%arg0: i32, %arg1: i32, %arg2: i32) -> (i32, i32) {
    %c0_i32 = arith.constant 0 : i32
    %c0_i32_0 = arith.constant 0 : i32
    return %c0_i32, %arg1 : i32, i32
  }
  func.func @transform_3(%arg0: i32, %arg1: i32, %arg2: i32) -> (i32, i32) {
    %c0_i32 = arith.constant 0 : i32
    return %arg0, %arg1 : i32, i32
  }
}

</mosaic_0001>

<llo_original>
// kernel: feature_extractor_forward.1
$region0: #{feature_extractor_forward.1}
  #allocation0 [shape = 'u32[]', space=smem, size = 0x4, offset = 0x4, fixed_abs, tag = 'smem constant byte address 0x4 - core index']
  #allocation1 [shape = 'u32[144,128]{1,0:T(1,128)}', space=vmem, size = 0x12000, scoped, tag = 'internal scratch']
  %s0 = inlined_call_operand.vmem [shape: f32[8,128], index: 0, kind: input, shape index: {}]
  %s1 = inlined_call_operand.hbm [shape: f32[128,128], index: 1, kind: input, shape index: {}]
  %s2 = inlined_call_operand.vmem [shape: f32[1,128], index: 2, kind: input, shape index: {}]
  %s3 = inlined_call_operand.hbm [shape: f32[8,128], index: 3, kind: output, shape index: {}]
  %s4 = sld [smem:[#allocation0]]
  $region34: #{feature_extractor_forward.1} parent=0
    _
  %s6 = ssub.s32 1, %s4
  %s7 = scalar_select 0, %s6, %s4
  $region1: #{feature_extractor_forward.1} parent=0
    #allocation2 [shape = 'u8[65536]{0}', space=vmem, size = 0x10000, scoped, tag = 'input window, operand 1, single buffered']
    #allocation3 [shape = 's32[1]{0}', space=sflag, size = 0x4, scoped, tag = 'scoped memory for feature_extractor_forward.1']
    #allocation4 [shape = 's32[1]{0}', space=sflag, size = 0x4, scoped, tag = 'scoped memory for feature_extractor_forward.1']
    #allocation5 [shape = 'u8[4096]{0}', space=vmem, size = 0x1000, scoped, tag = 'output window, operand 0, single buffered']
    %8 = vsyncpa [#allocation3], 0
    %9 = vsyncpa [#allocation4], 0
    // Predicated region
    $region2: #{feature_extractor_forward.1} parent=1 // pred_check
      _
    $region3: #{feature_extractor_forward.1} parent=1 // pred_check_branch
      %11 = sbr.rel (0) target = $region5
    $region4: #{feature_extractor_forward.1} parent=1 // pred_region
      _
    $region5: #{feature_extractor_forward.1} parent=1 // pred_fallthru
      _
    // Predicated region
    $region6: #{feature_extractor_forward.1} parent=1 // pred_check
      _
    $region7: #{feature_extractor_forward.1} parent=1 // pred_check_branch
      %13 = sbr.rel (0) target = $region9
    $region8: #{feature_extractor_forward.1} parent=1 // pred_region
      %s15 = ssub.s32 2048, 2048
      %16 = vsyncadd [#allocation3], %s15
      %s17 = sshll.u32 [#allocation2], 4
      %s18 = int_to_ptr.vmem [resolvable:$true] %s17
      %23 = dma.hbm_to_vmem [thread:$0]  %s1, 2048, %s18, [#allocation3], 128, 128, 8
    $region9: #{feature_extractor_forward.1} parent=1 // pred_fallthru
      _
    // Predicated region
    $region10: #{feature_extractor_forward.1} parent=1 // pred_check
      _
    $region11: #{feature_extractor_forward.1} parent=1 // pred_check_branch
      %25 = sbr.rel (0) target = $region13
    $region12: #{feature_extractor_forward.1} parent=1 // pred_region
      _
    $region13: #{feature_extractor_forward.1} parent=1 // pred_fallthru
      _
    // Predicated region
    $region14: #{feature_extractor_forward.1} parent=1 // pred_check
      _
    $region15: #{feature_extractor_forward.1} parent=1 // pred_check_branch
      %27 = sbr.rel (0) target = $region17
    $region16: #{feature_extractor_forward.1} parent=1 // pred_region
      %28 = dma.done [#allocation3], 2048
    $region17: #{feature_extractor_forward.1} parent=1 // pred_fallthru
      _
    %p29 = scmp.eq.s32.totalorder 0, 0
    // Predicated region
    $region18: #{feature_extractor_forward.1} parent=1 // pred_check
      %p30 = pneg %p29
    $region19: #{feature_extractor_forward.1} parent=1 // pred_check_branch
      %32 = sbr.rel (%p30) target = $region21
    $region20: #{feature_extractor_forward.1} parent=1 // pred_region
      %33 = vst [vmem:[#allocation5] sm:$0xff] 0.0
    $region21: #{feature_extractor_forward.1} parent=1 // pred_fallthru
      _
    %v34 = vld [vmem:[#allocation5] sm:$0xff]
    %v35 = vld [vmem:[%s0] sm:$0xff]
    %v36 = vld [vmem:[#allocation2] sm:$0xff]
    %v37 = vld [vmem:[#allocation2 + $0x8] sm:$0xff]
    %v38 = vld [vmem:[#allocation2 + $0x10] sm:$0xff]
    %v39 = vld [vmem:[#allocation2 + $0x18] sm:$0xff]
    %v40 = vld [vmem:[#allocation2 + $0x20] sm:$0xff]
    %v41 = vld [vmem:[#allocation2 + $0x28] sm:$0xff]
    %v42 = vld [vmem:[#allocation2 + $0x30] sm:$0xff]
    %v43 = vld [vmem:[#allocation2 + $0x38] sm:$0xff]
    %v44 = vld [vmem:[#allocation2 + $0x40] sm:$0xff]
    %v45 = vld [vmem:[#allocation2 + $0x48] sm:$0xff]
    %v46 = vld [vmem:[#allocation2 + $0x50] sm:$0xff]
    %v47 = vld [vmem:[#allocation2 + $0x58] sm:$0xff]
    %v48 = vld [vmem:[#allocation2 + $0x60] sm:$0xff]
    %v49 = vld [vmem:[#allocation2 + $0x68] sm:$0xff]
    %v50 = vld [vmem:[#allocation2 + $0x70] sm:$0xff]
    %v51 = vld [vmem:[#allocation2 + $0x78] sm:$0xff]
    %52 = vmatprep.subr.mxu0 0.0
    %53 = vmatpush1.xpose.msra.mxu0 %v36
    %54 = vmatprep.subr.mxu0 0.0
    %55 = vmatpush1.xpose.msra.mxu0 %v37
    %56 = vmatprep.subr.mxu0 0.0
    %57 = vmatpush1.xpose.msra.mxu0 %v38
    %58 = vmatprep.subr.mxu0 0.0
    %59 = vmatpush1.xpose.msra.mxu0 %v39
    %60 = vmatprep.subr.mxu0 0.0
    %61 = vmatpush1.xpose.msra.mxu0 %v40
    %62 = vmatprep.subr.mxu0 0.0
    %63 = vmatpush1.xpose.msra.mxu0 %v41
    %64 = vmatprep.subr.mxu0 0.0
    %65 = vmatpush1.xpose.msra.mxu0 %v42
    %66 = vmatprep.subr.mxu0 0.0
    %67 = vmatpush1.xpose.msra.mxu0 %v43
    %68 = vmatprep.subr.mxu0 0.0
    %69 = vmatpush1.xpose.msra.mxu0 %v44
    %70 = vmatprep.subr.mxu0 0.0
    %71 = vmatpush1.xpose.msra.mxu0 %v45
    %72 = vmatprep.subr.mxu0 0.0
    %73 = vmatpush1.xpose.msra.mxu0 %v46
    %74 = vmatprep.subr.mxu0 0.0
    %75 = vmatpush1.xpose.msra.mxu0 %v47
    %76 = vmatprep.subr.mxu0 0.0
    %77 = vmatpush1.xpose.msra.mxu0 %v48
    %78 = vmatprep.subr.mxu0 0.0
    %79 = vmatpush1.xpose.msra.mxu0 %v49
    %80 = vmatprep.subr.mxu0 0.0
    %81 = vmatpush1.xpose.msra.mxu0 %v50
    %82 = vmatprep.subr.mxu0 0.0
    %83 = vmatpush1.xpose.msra.mxu0 %v51
    %84 = vmatprep.subr.mxu0 0.0
    %85 = vmatpush1.xpose.msra.mxu0 0.0
    %86 = vmatprep.subr.mxu0 0.0
    %87 = vmatpush1.xpose.msra.mxu0 0.0
    %88 = vmatprep.subr.mxu0 0.0
    %89 = vmatpush1.xpose.msra.mxu0 0.0
    %90 = vmatprep.subr.mxu0 0.0
    %91 = vmatpush1.xpose.msra.mxu0 0.0
    %92 = vmatprep.subr.mxu0 0.0
    %93 = vmatpush1.xpose.msra.mxu0 0.0
    %94 = vmatprep.subr.mxu0 0.0
    %95 = vmatpush1.xpose.msra.mxu0 0.0
    %96 = vmatprep.subr.mxu0 0.0
    %97 = vmatpush1.xpose.msra.mxu0 0.0
    %98 = vmatprep.subr.mxu0 0.0
    %99 = vmatpush1.xpose.msra.mxu0 0.0
    %100 = vmatprep.subr.mxu0 0.0
    %101 = vmatpush1.xpose.msra.mxu0 0.0
    %102 = vmatprep.subr.mxu0 0.0
    %103 = vmatpush1.xpose.msra.mxu0 0.0
    %104 = vmatprep.subr.mxu0 0.0
    %105 = vmatpush1.xpose.msra.mxu0 0.0
    %106 = vmatprep.subr.mxu0 0.0
    %107 = vmatpush1.xpose.msra.mxu0 0.0
    %108 = vmatprep.subr.mxu0 0.0
    %109 = vmatpush1.xpose.msra.mxu0 0.0
    %110 = vmatprep.subr.mxu0 0.0
    %111 = vmatpush1.xpose.msra.mxu0 0.0
    %112 = vmatprep.subr.mxu0 0.0
    %113 = vmatpush1.xpose.msra.mxu0 0.0
    %114 = vmatprep.subr.mxu0 0.0
    %115 = vmatpush1.xpose.msra.mxu0 0.0
    %116 = vmatprep.mubr.f32.mxu0 0.0
    %117 = vmatmul.mubr.f32.gmra.mrb[0].mxu0 %v35
    %v118 = vpop.f32.mrb[0].mxu0
    %v119 = vadd.f32 0.0, %v118
    %v120 = vpop.f32.mrb[0].mxu0
    %121 = vdwg.mxu0
    %v122 = vadd.f32 %v34, %v119
    %123 = vst [vmem:[#allocation5] sm:$0xff] %v122
    // Predicated region
    $region22: #{feature_extractor_forward.1} parent=1 // pred_check
      %p124 = pneg %p29
    $region23: #{feature_extractor_forward.1} parent=1 // pred_check_branch
      %126 = sbr.rel (%p124) target = $region25
    $region24: #{feature_extractor_forward.1} parent=1 // pred_region
      %v127 = vld [vmem:[#allocation5] sm:$0xff]
      %v128 = vld [vmem:[%s2] sm:$0x1]
      %v130 = vlaneseq
      %v131 = vshrl.u32 %v130, 7
      %v132 = vsub.s32 0, %v131
      %v133 = vrot.slane %v128, %v132
      %v135 = vadd.f32 %v127, %v133
      %v136 = vmax.f32 %v135, 0.0
      %137 = vst [vmem:[#allocation5] sm:$0xff] %v136
    $region25: #{feature_extractor_forward.1} parent=1 // pred_fallthru
      _
    // Predicated region
    $region26: #{feature_extractor_forward.1} parent=1 // pred_check
      _
    $region27: #{feature_extractor_forward.1} parent=1 // pred_check_branch
      %139 = sbr.rel (0) target = $region29
    $region28: #{feature_extractor_forward.1} parent=1 // pred_region
      %s141 = ssub.s32 128, 128
      %142 = vsyncadd [#allocation4], %s141
      %s144 = sshll.u32 [#allocation5], 4
      %s145 = int_to_ptr.vmem [resolvable:$true] %s144
      %147 = dma.vmem_to_hbm [thread:$0]  %s145, 128, %s3, [#allocation4]
    $region29: #{feature_extractor_forward.1} parent=1 // pred_fallthru
      _
    // Predicated region
    $region30: #{feature_extractor_forward.1} parent=1 // pred_check
      _
    $region31: #{feature_extractor_forward.1} parent=1 // pred_check_branch
      %149 = sbr.rel (0) target = $region33
    $region32: #{feature_extractor_forward.1} parent=1 // pred_region
      %150 = dma.done [#allocation4], 128
    $region33: #{feature_extractor_forward.1} parent=1 // pred_fallthru
      _
    %151 = vsyncpa [#allocation3], 1
    %152 = vsyncpa [#allocation4], 1

</llo_original>
